<compile_context>
chip_gen: v7x
topology: tpu7x:2x2x1
jax: 0.10.0
libtpu: 0.0.40
codegen_flags: <defaults>
</compile_context>

<pallas_src>
import jax
import jax.numpy as jnp
from jax import lax
from jax.experimental import pallas as pl
from jax.experimental.pallas import tpu as pltpu

NEG_SLOPE = 0.01          # nn.LeakyReLU default
BN_EPS = 1e-5             # nn.BatchNorm1d default
LANE = 128
MAX_ROWS = 2048           # rows per grid step (fits default scoped VMEM on all gens)
VMEM_CAP = 48 * 2 ** 20   # per-step VMEM cap (v7x has only 64 MiB per TensorCore)


def _round_up(a, m):
    return (a + m - 1) // m * m


def _cdiv(a, b):
    return (a + b - 1) // b


def _make_kernel(K, P, S, L, Rb, Mb, matmul_dtype):
    """K taps, pad P, per-sample row stride S, valid length L, Rb rows/block."""

    def kernel(x_ref, w1_ref, t1_ref, w2_ref, t2_ref, o_ref, hpad_ref):
        Cp = x_ref.shape[-1]
        md = matmul_dtype

        # LHS taps for conv1: cast the block once (bf16 path), slice per tap.
        if md != x_ref.dtype:
            xb = x_ref[...].astype(md)
            tap = lambda k: xb[k:k + Mb, :]
        else:
            tap = lambda k: x_ref[pl.ds(k, Mb), :]

        # ---- conv1 (+ folded bias/BN1): K shifted (Mb,Cp)@(Cp,Cp) MXU matmuls
        acc = jnp.dot(tap(0), w1_ref[0], preferred_element_type=jnp.float32)
        for k in range(1, K):
            acc += jnp.dot(tap(k), w1_ref[k], preferred_element_type=jnp.float32)
        h = acc + t1_ref[...]
        h = jnp.where(h >= 0, h, NEG_SLOPE * h)            # act1: LeakyReLU

        # in-kernel row-validity mask: zero the inter-sample padding rows
        row = lax.broadcasted_iota(jnp.int32, (Mb, Cp), 0)
        h = jnp.where((row % S) < L, h, 0.0)

        # ---- stage per-sample zero-padded h for conv2 (only 2P halo rows zeroed)
        if P > 0:
            halo = jnp.zeros((P, Cp), hpad_ref.dtype)
            hpad_ref[pl.ds(0, P), :] = halo
            hpad_ref[pl.ds(Rb - P, P), :] = halo
        hpad_ref[pl.ds(P, Mb), :] = h.astype(hpad_ref.dtype)

        # ---- conv2 (+ folded bias/BN2) + residual + act2
        acc2 = jnp.dot(hpad_ref[pl.ds(0, Mb), :], w2_ref[0],
                       preferred_element_type=jnp.float32)
        for k in range(1, K):
            acc2 += jnp.dot(hpad_ref[pl.ds(k, Mb), :], w2_ref[k],
                            preferred_element_type=jnp.float32)
        y = acc2 + t2_ref[...]
        y = y + x_ref[pl.ds(P, Mb), :].astype(jnp.float32)  # identity shortcut
        y = jnp.where(y >= 0, y, NEG_SLOPE * y)             # act2: LeakyReLU

        # single aligned Rb-row store (pad the K-1 tail rows in-register)
        if Mb < Rb:
            y = jnp.concatenate([y, jnp.zeros((Rb - Mb, Cp), y.dtype)], axis=0)
        o_ref[...] = y.astype(o_ref.dtype)

    return kernel


def basic_block_forward(x, params, ker_size, first_dilation,
                        matmul_dtype=jnp.bfloat16):
    """x: (N, C, L) float32 (PyTorch NCL). Returns (N, C, L)."""
    (w1, b1, g1, be1, m1, v1, w2, b2, g2, be2, m2, v2) = params
    N, Cin, L = x.shape
    planes = w1.shape[0]
    K = ker_size
    P = ker_size // 2

    # identity-shortcut config only (see TODOs above)
    assert planes == Cin and first_dilation == P and K % 2 == 1

    # ---- lane packing: several samples side-by-side within the 128 lanes ----
    if Cin >= LANE:
        Cpack = 1
        Cp = _round_up(Cin, LANE)
    else:
        Cpack = max(1, min(LANE // Cin, N))
        Cp = LANE
    Cl = Cpack * Cin                          # lanes actually carrying data
    Ngroups = _cdiv(N, Cpack)
    S = _round_up(L + 2 * P, 8)               # per-sample row stride (sublane aligned)

    # ---- cdiv-based tiling over sample groups ----
    NB_fit = max(1, MAX_ROWS // S)            # also covers S > MAX_ROWS (NB_fit=1)
    if Ngroups <= 1:
        NB = 1
    else:
        NB = max(1, min(NB_fit, _cdiv(Ngroups, 2)))   # keep >=2 grid steps (megacore)
    G = _cdiv(Ngroups, NB)
    Ngroups_pad = G * NB
    Rb = NB * S
    Mb = Rb - (K - 1)

    # ---- per-step VMEM sizing / explicit limit ----
    itemsz = jnp.dtype(matmul_dtype).itemsize
    blk = Rb * Cp * 4
    vmem_need = (4 * blk                          # input + output, double buffered
                 + Rb * Cp * itemsz               # hpad scratch
                 + 4 * K * Cp * Cp * itemsz       # two weight stacks, double buffered
                 + 4 * blk)                       # in-kernel temporaries headroom
    if vmem_need > VMEM_CAP:
        raise ValueError(
            f"per-step VMEM {vmem_need >> 20} MiB exceeds {VMEM_CAP >> 20} MiB; "
            f"sequence length L={L} too long for MAX_ROWS={MAX_ROWS}")
    vmem_limit = int(min(VMEM_CAP, max(32 * 2 ** 20, vmem_need)))

    # ---- channel-last, sample-packed, zero-padded, flattened (G*Rb, Cp) input ----
    x_t = jnp.transpose(x, (0, 2, 1))                               # (N, L, C)
    x_t = jnp.pad(x_t, ((0, Ngroups * Cpack - N), (0, 0), (0, 0)))  # pad fake samples
    x_g = x_t.reshape(Ngroups, Cpack, L, Cin)
    x_g = jnp.transpose(x_g, (0, 2, 1, 3)).reshape(Ngroups, L, Cl)
    x_p = jnp.pad(x_g, ((0, Ngroups_pad - Ngroups),
                        (P, S - L - P), (0, Cp - Cl)))              # (Gpad, S, Cp)
    X = x_p.reshape(Ngroups_pad * S, Cp)

    # ---- fold conv bias + eval-mode BN; block-diagonal packed weights ----
    s1 = g1 / jnp.sqrt(v1 + BN_EPS)
    t1 = b1 * s1 + (be1 - m1 * s1)
    s2 = g2 / jnp.sqrt(v2 + BN_EPS)
    t2 = b2 * s2 + (be2 - m2 * s2)
    w1_k = jnp.transpose(w1, (2, 1, 0)) * s1[None, None, :]         # (K, Cin, planes)
    w2_k = jnp.transpose(w2, (2, 1, 0)) * s2[None, None, :]
    eye = jnp.eye(Cpack, dtype=w1_k.dtype)
    block_diag = jax.vmap(lambda w: jnp.kron(eye, w))
    w1_bd = block_diag(w1_k)                                        # (K, Cl, Cl)
    w2_bd = block_diag(w2_k)
    w1_p = jnp.pad(w1_bd, ((0, 0), (0, Cp - Cl), (0, Cp - Cl))).astype(matmul_dtype)
    w2_p = jnp.pad(w2_bd, ((0, 0), (0, Cp - Cl), (0, Cp - Cl))).astype(matmul_dtype)
    t1_p = jnp.pad(jnp.tile(t1, Cpack), (0, Cp - Cl)).reshape(1, Cp).astype(jnp.float32)
    t2_p = jnp.pad(jnp.tile(t2, Cpack), (0, Cp - Cl)).reshape(1, Cp).astype(jnp.float32)

    kernel = _make_kernel(K, P, S, L, Rb, Mb, matmul_dtype)
    const3 = lambda i: (0, 0, 0)
    const2 = lambda i: (0, 0)

    out_flat = pl.pallas_call(
        kernel,
        out_shape=jax.ShapeDtypeStruct((G * Rb, Cp), x.dtype),
        grid=(G,),
        in_specs=[
            pl.BlockSpec((Rb, Cp), lambda i: (i, 0)),     # packed padded input
            pl.BlockSpec((K, Cp, Cp), const3),            # w1 (BN folded, block-diag)
            pl.BlockSpec((1, Cp), const2),                # shift1 (bias+BN folded)
            pl.BlockSpec((K, Cp, Cp), const3),            # w2
            pl.BlockSpec((1, Cp), const2),                # shift2
        ],
        out_specs=pl.BlockSpec((Rb, Cp), lambda i: (i, 0)),
        scratch_shapes=[pltpu.VMEM((Rb, Cp), matmul_dtype)],
        compiler_params=pltpu.CompilerParams(
            dimension_semantics=("parallel",),
            vmem_limit_bytes=vmem_limit),
    )(X, w1_p, t1_p, w2_p, t2_p)

    # unpack: groups -> samples, drop pad rows / pad lanes, back to NCL
    out = out_flat.reshape(Ngroups_pad, S, Cp)[:Ngroups, :L, :Cl]
    out = out.reshape(Ngroups, L, Cpack, Cin)
    out = jnp.transpose(out, (0, 2, 1, 3)).reshape(Ngroups * Cpack, L, Cin)[:N]
    return jnp.transpose(out, (0, 2, 1))                  # back to (N, C, L)


def reference_forward(x, params, ker_size, first_dilation):
    """Pure-JAX reference mirroring the PyTorch forward (BN in eval mode)."""
    (w1, b1, g1, be1, m1, v1, w2, b2, g2, be2, m2, v2) = params

    def conv1d(x, w, b, pad):
        y = lax.conv_general_dilated(
            x, w, window_strides=(1,), padding=[(pad, pad)],
            dimension_numbers=("NCH", "OIH", "NCH"))
        return y + b[None, :, None]

    def bn(x, g, be, m, v):
        return (x - m[None, :, None]) / jnp.sqrt(v[None, :, None] + BN_EPS) \
               * g[None, :, None] + be[None, :, None]

    def lrelu(x):
        return jnp.where(x >= 0, x, NEG_SLOPE * x)

    shortcut = x
    h = lrelu(bn(conv1d(x, w1, b1, first_dilation), g1, be1, m1, v1))
    y = bn(conv1d(h, w2, b2, ker_size // 2), g2, be2, m2, v2)
    return lrelu(y + shortcut)


if __name__ == "__main__":
    # small shapes: batch=2, channels(inplanes=planes)=8, length=16, ker_size=3
    N, C, L = 2, 8, 16
    ker_size = 3
    first_dilation = ker_size // 2  # =1, keeps length with stride 1

    key = jax.random.PRNGKey(0)
    ks = jax.random.split(key, 13)

    w1 = 0.1 * jax.random.normal(ks[0], (C, C, ker_size), jnp.float32)
    b1 = 0.1 * jax.random.normal(ks[1], (C,), jnp.float32)
    g1 = 1.0 + 0.1 * jax.random.normal(ks[2], (C,), jnp.float32)
    be1 = 0.1 * jax.random.normal(ks[3], (C,), jnp.float32)
    m1 = 0.1 * jax.random.normal(ks[4], (C,), jnp.float32)
    v1 = 0.5 + jnp.abs(jax.random.normal(ks[5], (C,), jnp.float32))

    w2 = 0.1 * jax.random.normal(ks[6], (C, C, ker_size), jnp.float32)
    b2 = 0.1 * jax.random.normal(ks[7], (C,), jnp.float32)
    g2 = 1.0 + 0.1 * jax.random.normal(ks[8], (C,), jnp.float32)
    be2 = 0.1 * jax.random.normal(ks[9], (C,), jnp.float32)
    m2 = 0.1 * jax.random.normal(ks[10], (C,), jnp.float32)
    v2 = 0.5 + jnp.abs(jax.random.normal(ks[11], (C,), jnp.float32))

    params = (w1, b1, g1, be1, m1, v1, w2, b2, g2, be2, m2, v2)
    x = jax.random.normal(ks[12], (N, C, L), jnp.float32)

    ref = reference_forward(x, params, ker_size, first_dilation)

    # exact-math path (f32 MXU inputs): strict check
    out_f32 = basic_block_forward(x, params, ker_size, first_dilation,
                                  matmul_dtype=jnp.float32)
    out_f32 = jax.block_until_ready(out_f32)
    assert out_f32.shape == (N, C, L)
    assert jnp.allclose(out_f32, ref, atol=1e-4, rtol=1e-4), \
        f"f32 path max abs err = {jnp.max(jnp.abs(out_f32 - ref))}"

    # default fast path (bf16 MXU inputs, f32 accumulation): looser tolerance
    out_bf16 = basic_block_forward(x, params, ker_size, first_dilation)
    out_bf16 = jax.block_until_ready(out_bf16)
    assert out_bf16.shape == (N, C, L)
    assert jnp.allclose(out_bf16, ref, atol=3e-2, rtol=3e-2), \
        f"bf16 path max abs err = {jnp.max(jnp.abs(out_bf16 - ref))}"

    print("KERNEL_OK")
</pallas_src>

<mosaic_0001>
module attributes {stable_mosaic.version = 11 : i64} {
  func.func @kernel(%arg0: i32, %arg1: memref<24x128xf32, #tpu.memory_space<vmem>>, %arg2: memref<3x128x128xf32, #tpu.memory_space<vmem>>, %arg3: memref<1x128xf32, #tpu.memory_space<vmem>>, %arg4: memref<3x128x128xf32, #tpu.memory_space<vmem>>, %arg5: memref<1x128xf32, #tpu.memory_space<vmem>>, %arg6: memref<24x128xf32, #tpu.memory_space<vmem>>, %arg7: memref<24x128xf32, #tpu.memory_space<vmem>>) attributes {dimension_semantics = [#tpu.dimension_semantics<parallel>], iteration_bounds = array<i64: 1>, scalar_prefetch = 0 : i64, scratch_operands = 1 : i64, tpu.core_type = #tpu.core_type<tc>, window_params = [{transform_indices = @transform_0, window_bounds = array<i64: 24, 128>}, {pipeline_mode = #tpu.pipeline_mode<synchronous>, transform_indices = @transform_1, window_bounds = array<i64: 3, 128, 128>}, {pipeline_mode = #tpu.pipeline_mode<synchronous>, transform_indices = @transform_2, window_bounds = array<i64: 1, 128>}, {pipeline_mode = #tpu.pipeline_mode<synchronous>, transform_indices = @transform_3, window_bounds = array<i64: 3, 128, 128>}, {pipeline_mode = #tpu.pipeline_mode<synchronous>, transform_indices = @transform_4, window_bounds = array<i64: 1, 128>}, {transform_indices = @transform_5, window_bounds = array<i64: 24, 128>}]} {
    %c0 = arith.constant 0 : index
    %c0_0 = arith.constant 0 : index
    %0 = vector.load %arg1[%c0, %c0_0] : memref<24x128xf32, #tpu.memory_space<vmem>>, vector<22x128xf32>
    %c0_1 = arith.constant 0 : index
    %c0_2 = arith.constant 0 : index
    %c0_3 = arith.constant 0 : index
    %1 = vector.load %arg2[%c0_1, %c0_2, %c0_3] : memref<3x128x128xf32, #tpu.memory_space<vmem>>, vector<1x128x128xf32>
    %2 = vector.shape_cast %1 : vector<1x128x128xf32> to vector<128x128xf32>
    %cst = arith.constant dense<0.000000e+00> : vector<22x128xf32>
    %3 = tpu.matmul %0, %2, %cst {dimension_numbers = #tpu.dot_dimension_numbers<[1], [0], [0], [1], [0, 0, 1, 1], [], []>} : vector<22x128xf32>, vector<128x128xf32>, vector<22x128xf32> -> vector<22x128xf32>
    %c1 = arith.constant 1 : index
    %c0_4 = arith.constant 0 : index
    %4 = vector.load %arg1[%c1, %c0_4] : memref<24x128xf32, #tpu.memory_space<vmem>>, vector<22x128xf32>
    %c1_5 = arith.constant 1 : index
    %c0_6 = arith.constant 0 : index
    %c0_7 = arith.constant 0 : index
    %5 = vector.load %arg2[%c1_5, %c0_6, %c0_7] : memref<3x128x128xf32, #tpu.memory_space<vmem>>, vector<1x128x128xf32>
    %6 = vector.shape_cast %5 : vector<1x128x128xf32> to vector<128x128xf32>
    %cst_8 = arith.constant dense<0.000000e+00> : vector<22x128xf32>
    %7 = tpu.matmul %4, %6, %cst_8 {dimension_numbers = #tpu.dot_dimension_numbers<[1], [0], [0], [1], [0, 0, 1, 1], [], []>} : vector<22x128xf32>, vector<128x128xf32>, vector<22x128xf32> -> vector<22x128xf32>
    %8 = arith.addf %3, %7 : vector<22x128xf32>
    %c2 = arith.constant 2 : index
    %c0_9 = arith.constant 0 : index
    %9 = vector.load %arg1[%c2, %c0_9] : memref<24x128xf32, #tpu.memory_space<vmem>>, vector<22x128xf32>
    %c2_10 = arith.constant 2 : index
    %c0_11 = arith.constant 0 : index
    %c0_12 = arith.constant 0 : index
    %10 = vector.load %arg2[%c2_10, %c0_11, %c0_12] : memref<3x128x128xf32, #tpu.memory_space<vmem>>, vector<1x128x128xf32>
    %11 = vector.shape_cast %10 : vector<1x128x128xf32> to vector<128x128xf32>
    %cst_13 = arith.constant dense<0.000000e+00> : vector<22x128xf32>
    %12 = tpu.matmul %9, %11, %cst_13 {dimension_numbers = #tpu.dot_dimension_numbers<[1], [0], [0], [1], [0, 0, 1, 1], [], []>} : vector<22x128xf32>, vector<128x128xf32>, vector<22x128xf32> -> vector<22x128xf32>
    %13 = arith.addf %8, %12 : vector<22x128xf32>
    %c0_14 = arith.constant 0 : index
    %c0_15 = arith.constant 0 : index
    %14 = vector.load %arg3[%c0_14, %c0_15] : memref<1x128xf32, #tpu.memory_space<vmem>>, vector<1x128xf32>
    %15 = vector.broadcast %14 : vector<1x128xf32> to vector<22x128xf32>
    %16 = arith.addf %13, %15 : vector<22x128xf32>
    %cst_16 = arith.constant 0.000000e+00 : f32
    %17 = vector.broadcast %cst_16 : f32 to vector<22x128xf32>
    %18 = arith.cmpf oge, %16, %17 : vector<22x128xf32>
    %cst_17 = arith.constant 0.00999999977 : f32
    %19 = vector.broadcast %cst_17 : f32 to vector<22x128xf32>
    %20 = arith.mulf %19, %16 : vector<22x128xf32>
    %21 = arith.select %18, %16, %20 : vector<22x128xi1>, vector<22x128xf32>
    %22 = tpu.iota {dimensions = array<i32: 0>} : vector<22x128xi32>
    %c24_i32 = arith.constant 24 : i32
    %c0_i32 = arith.constant 0 : i32
    %23 = arith.cmpi eq, %c24_i32, %c0_i32 : i32
    %c1_i32 = arith.constant 1 : i32
    %24 = arith.select %23, %c1_i32, %c24_i32 : i32
    %25 = vector.broadcast %24 : i32 to vector<22x128xi32>
    %26 = arith.remsi %22, %25 : vector<22x128xi32>
    %c0_i32_18 = arith.constant 0 : i32
    %27 = vector.broadcast %c0_i32_18 : i32 to vector<22x128xi32>
    %28 = arith.cmpi ne, %26, %27 : vector<22x128xi32>
    %c0_i32_19 = arith.constant 0 : i32
    %29 = vector.broadcast %c0_i32_19 : i32 to vector<22x128xi32>
    %30 = arith.cmpi slt, %26, %29 : vector<22x128xi32>
    %c0_i32_20 = arith.constant 0 : i32
    %31 = arith.cmpi slt, %24, %c0_i32_20 : i32
    %32 = vector.broadcast %31 : i1 to vector<22x128xi1>
    %33 = vector.broadcast %32 : vector<22x128xi1> to vector<22x128xi1>
    %34 = arith.xori %30, %33 : vector<22x128xi1>
    %35 = arith.andi %34, %28 : vector<22x128xi1>
    %36 = vector.broadcast %24 : i32 to vector<22x128xi32>
    %37 = arith.addi %26, %36 : vector<22x128xi32>
    %38 = arith.select %35, %37, %26 : vector<22x128xi1>, vector<22x128xi32>
    %c16_i32 = arith.constant 16 : i32
    %39 = vector.broadcast %c16_i32 : i32 to vector<22x128xi32>
    %40 = arith.cmpi slt, %38, %39 : vector<22x128xi32>
    %cst_21 = arith.constant 0.000000e+00 : f32
    %41 = vector.broadcast %cst_21 : f32 to vector<22x128xf32>
    %42 = arith.select %40, %21, %41 : vector<22x128xi1>, vector<22x128xf32>
    %cst_22 = arith.constant 0.000000e+00 : f32
    %43 = vector.broadcast %cst_22 : f32 to vector<1x128xf32>
    %c0_23 = arith.constant 0 : index
    %c0_24 = arith.constant 0 : index
    %44 = vector.load %arg7[%c0_23, %c0_24] : memref<24x128xf32, #tpu.memory_space<vmem>>, vector<1x128xf32>
    tpu.vector_store %arg7[%c0_23, %c0_24], %43 {strides = array<i32>} : memref<24x128xf32, #tpu.memory_space<vmem>>, vector<1x128xf32>,
    %c23 = arith.constant 23 : index
    %c0_25 = arith.constant 0 : index
    %45 = vector.load %arg7[%c23, %c0_25] : memref<24x128xf32, #tpu.memory_space<vmem>>, vector<1x128xf32>
    tpu.vector_store %arg7[%c23, %c0_25], %43 {strides = array<i32>} : memref<24x128xf32, #tpu.memory_space<vmem>>, vector<1x128xf32>,
    %c1_26 = arith.constant 1 : index
    %c0_27 = arith.constant 0 : index
    %46 = vector.load %arg7[%c1_26, %c0_27] : memref<24x128xf32, #tpu.memory_space<vmem>>, vector<22x128xf32>
    tpu.vector_store %arg7[%c1_26, %c0_27], %42 {strides = array<i32>} : memref<24x128xf32, #tpu.memory_space<vmem>>, vector<22x128xf32>,
    %c0_28 = arith.constant 0 : index
    %c0_29 = arith.constant 0 : index
    %47 = vector.load %arg7[%c0_28, %c0_29] : memref<24x128xf32, #tpu.memory_space<vmem>>, vector<22x128xf32>
    %c0_30 = arith.constant 0 : index
    %c0_31 = arith.constant 0 : index
    %c0_32 = arith.constant 0 : index
    %48 = vector.load %arg4[%c0_30, %c0_31, %c0_32] : memref<3x128x128xf32, #tpu.memory_space<vmem>>, vector<1x128x128xf32>
    %49 = vector.shape_cast %48 : vector<1x128x128xf32> to vector<128x128xf32>
    %cst_33 = arith.constant dense<0.000000e+00> : vector<22x128xf32>
    %50 = tpu.matmul %47, %49, %cst_33 {dimension_numbers = #tpu.dot_dimension_numbers<[1], [0], [0], [1], [0, 0, 1, 1], [], []>} : vector<22x128xf32>, vector<128x128xf32>, vector<22x128xf32> -> vector<22x128xf32>
    %c1_34 = arith.constant 1 : index
    %c0_35 = arith.constant 0 : index
    %51 = vector.load %arg7[%c1_34, %c0_35] : memref<24x128xf32, #tpu.memory_space<vmem>>, vector<22x128xf32>
    %c1_36 = arith.constant 1 : index
    %c0_37 = arith.constant 0 : index
    %c0_38 = arith.constant 0 : index
    %52 = vector.load %arg4[%c1_36, %c0_37, %c0_38] : memref<3x128x128xf32, #tpu.memory_space<vmem>>, vector<1x128x128xf32>
    %53 = vector.shape_cast %52 : vector<1x128x128xf32> to vector<128x128xf32>
    %cst_39 = arith.constant dense<0.000000e+00> : vector<22x128xf32>
    %54 = tpu.matmul %51, %53, %cst_39 {dimension_numbers = #tpu.dot_dimension_numbers<[1], [0], [0], [1], [0, 0, 1, 1], [], []>} : vector<22x128xf32>, vector<128x128xf32>, vector<22x128xf32> -> vector<22x128xf32>
    %55 = arith.addf %50, %54 : vector<22x128xf32>
    %c2_40 = arith.constant 2 : index
    %c0_41 = arith.constant 0 : index
    %56 = vector.load %arg7[%c2_40, %c0_41] : memref<24x128xf32, #tpu.memory_space<vmem>>, vector<22x128xf32>
    %c2_42 = arith.constant 2 : index
    %c0_43 = arith.constant 0 : index
    %c0_44 = arith.constant 0 : index
    %57 = vector.load %arg4[%c2_42, %c0_43, %c0_44] : memref<3x128x128xf32, #tpu.memory_space<vmem>>, vector<1x128x128xf32>
    %58 = vector.shape_cast %57 : vector<1x128x128xf32> to vector<128x128xf32>
    %cst_45 = arith.constant dense<0.000000e+00> : vector<22x128xf32>
    %59 = tpu.matmul %56, %58, %cst_45 {dimension_numbers = #tpu.dot_dimension_numbers<[1], [0], [0], [1], [0, 0, 1, 1], [], []>} : vector<22x128xf32>, vector<128x128xf32>, vector<22x128xf32> -> vector<22x128xf32>
    %60 = arith.addf %55, %59 : vector<22x128xf32>
    %c0_46 = arith.constant 0 : index
    %c0_47 = arith.constant 0 : index
    %61 = vector.load %arg5[%c0_46, %c0_47] : memref<1x128xf32, #tpu.memory_space<vmem>>, vector<1x128xf32>
    %62 = vector.broadcast %61 : vector<1x128xf32> to vector<22x128xf32>
    %63 = arith.addf %60, %62 : vector<22x128xf32>
    %c1_48 = arith.constant 1 : index
    %c0_49 = arith.constant 0 : index
    %64 = vector.load %arg1[%c1_48, %c0_49] : memref<24x128xf32, #tpu.memory_space<vmem>>, vector<22x128xf32>
    %65 = arith.addf %63, %64 : vector<22x128xf32>
    %cst_50 = arith.constant 0.000000e+00 : f32
    %66 = vector.broadcast %cst_50 : f32 to vector<22x128xf32>
    %67 = arith.cmpf oge, %65, %66 : vector<22x128xf32>
    %cst_51 = arith.constant 0.00999999977 : f32
    %68 = vector.broadcast %cst_51 : f32 to vector<22x128xf32>
    %69 = arith.mulf %68, %65 : vector<22x128xf32>
    %70 = arith.select %67, %65, %69 : vector<22x128xi1>, vector<22x128xf32>
    %cst_52 = arith.constant 0.000000e+00 : f32
    %71 = vector.broadcast %cst_52 : f32 to vector<2x128xf32>
    %72 = tpu.concatenate %70, %71 in 0 : vector<22x128xf32>, vector<2x128xf32> -> vector<24x128xf32>
    %c0_53 = arith.constant 0 : index
    %c0_54 = arith.constant 0 : index
    %73 = vector.load %arg6[%c0_53, %c0_54] : memref<24x128xf32, #tpu.memory_space<vmem>>, vector<24x128xf32>
    tpu.vector_store %arg6[%c0_53, %c0_54], %72 {strides = array<i32>} : memref<24x128xf32, #tpu.memory_space<vmem>>, vector<24x128xf32>,
    return
  }
  func.func @transform_0(%arg0: i32) -> (i32, i32) {
    %c0_i32 = arith.constant 0 : i32
    %c0_i32_0 = arith.constant 0 : i32
    return %arg0, %c0_i32 : i32, i32
  }
  func.func @transform_1(%arg0: i32) -> (i32, i32, i32) {
    %c0_i32 = arith.constant 0 : i32
    %c0_i32_0 = arith.constant 0 : i32
    %c0_i32_1 = arith.constant 0 : i32
    %c0_i32_2 = arith.constant 0 : i32
    return %c0_i32, %c0_i32_0, %c0_i32_1 : i32, i32, i32
  }
  func.func @transform_2(%arg0: i32) -> (i32, i32) {
    %c0_i32 = arith.constant 0 : i32
    %c0_i32_0 = arith.constant 0 : i32
    %c0_i32_1 = arith.constant 0 : i32
    return %c0_i32, %c0_i32_0 : i32, i32
  }
  func.func @transform_3(%arg0: i32) -> (i32, i32, i32) {
    %c0_i32 = arith.constant 0 : i32
    %c0_i32_0 = arith.constant 0 : i32
    %c0_i32_1 = arith.constant 0 : i32
    %c0_i32_2 = arith.constant 0 : i32
    return %c0_i32, %c0_i32_0, %c0_i32_1 : i32, i32, i32
  }
  func.func @transform_4(%arg0: i32) -> (i32, i32) {
    %c0_i32 = arith.constant 0 : i32
    %c0_i32_0 = arith.constant 0 : i32
    %c0_i32_1 = arith.constant 0 : i32
    return %c0_i32, %c0_i32_0 : i32, i32
  }
  func.func @transform_5(%arg0: i32) -> (i32, i32) {
    %c0_i32 = arith.constant 0 : i32
    %c0_i32_0 = arith.constant 0 : i32
    return %arg0, %c0_i32 : i32, i32
  }
}

</mosaic_0001>

<llo_original>
// kernel: tpu_custom_call.1
$region0: #{tpu_custom_call.1}
  #allocation0 [shape = 'u32[]', space=smem, size = 0x4, offset = 0x4, fixed_abs, tag = 'smem constant byte address 0x4 - core index']
  #allocation1 [shape = 'u32[144,128]{1,0:T(1,128)}', space=vmem, size = 0x12000, scoped, tag = 'internal scratch']
  #allocation2 [shape = 'f32[24,128]{1,0:T(8,128)}', space=vmem, size = 0x3000, scoped, tag = 'scratch operand']
  %s0 = inlined_call_operand.hbm [shape: f32[24,128], index: 0, kind: input, shape index: {}]
  %s1 = inlined_call_operand.hbm [shape: f32[3,128,128], index: 1, kind: input, shape index: {}]
  %s2 = inlined_call_operand.vmem [shape: f32[1,128], index: 2, kind: input, shape index: {}]
  %s3 = inlined_call_operand.hbm [shape: f32[3,128,128], index: 3, kind: input, shape index: {}]
  %s4 = inlined_call_operand.vmem [shape: f32[1,128], index: 4, kind: input, shape index: {}]
  %s5 = inlined_call_operand.hbm [shape: f32[24,128], index: 5, kind: output, shape index: {}]
  %s6 = sld [smem:[#allocation0]]
  $region42: #{tpu_custom_call.1} parent=0
    _
  %s8 = ssub.s32 1, %s6
  %s9 = scalar_select 0, %s8, %s6
  $region1: #{tpu_custom_call.1} parent=0
    #allocation3 [shape = 'u8[12288]{0}', space=vmem, size = 0x3000, scoped, tag = 'input window, operand 0, single buffered']
    #allocation4 [shape = 's32[1]{0}', space=sflag, size = 0x4, scoped, tag = 'scoped memory for tpu_custom_call.1']
    #allocation5 [shape = 's32[1]{0}', space=sflag, size = 0x4, scoped, tag = 'scoped memory for tpu_custom_call.1']
    #allocation6 [shape = 'u8[196608]{0}', space=vmem, size = 0x30000, scoped, tag = 'input window, operand 1, single buffered']
    #allocation7 [shape = 's32[1]{0}', space=sflag, size = 0x4, scoped, tag = 'scoped memory for tpu_custom_call.1']
    #allocation8 [shape = 'u8[196608]{0}', space=vmem, size = 0x30000, scoped, tag = 'input window, operand 3, single buffered']
    #allocation9 [shape = 'u8[12288]{0}', space=vmem, size = 0x3000, scoped, tag = 'output window, operand 0, single buffered']
    %10 = vsyncpa [#allocation4], 0
    %11 = vsyncpa [#allocation7], 0
    %12 = vsyncpa [#allocation5], 0
    // Predicated region
    $region2: #{tpu_custom_call.1} parent=1 // pred_check
      _
    $region3: #{tpu_custom_call.1} parent=1 // pred_check_branch
      %14 = sbr.rel (0) target = $region5
    $region4: #{tpu_custom_call.1} parent=1 // pred_region
      %s16 = ssub.s32 384, 384
      %17 = vsyncadd [#allocation4], %s16
      %s18 = sshll.u32 [#allocation3], 4
      %s19 = int_to_ptr.vmem [resolvable:$true] %s18
      %24 = dma.hbm_to_vmem [thread:$0]  %s0, 384, %s19, [#allocation4], 128, 128, 8
    $region5: #{tpu_custom_call.1} parent=1 // pred_fallthru
      _
    // Predicated region
    $region6: #{tpu_custom_call.1} parent=1 // pred_check
      _
    $region7: #{tpu_custom_call.1} parent=1 // pred_check_branch
      %26 = sbr.rel (0) target = $region9
    $region8: #{tpu_custom_call.1} parent=1 // pred_region
      %s28 = ssub.s32 6144, 6144
      %29 = vsyncadd [#allocation7], %s28
      %s30 = sshll.u32 [#allocation6], 4
      %s31 = int_to_ptr.vmem [resolvable:$true] %s30
      %36 = dma.hbm_to_vmem [thread:$0]  %s1, 6144, %s31, [#allocation7], 128, 128, 8
    $region9: #{tpu_custom_call.1} parent=1 // pred_fallthru
      _
    // Predicated region
    $region10: #{tpu_custom_call.1} parent=1 // pred_check
      _
    $region11: #{tpu_custom_call.1} parent=1 // pred_check_branch
      %38 = sbr.rel (0) target = $region13
    $region12: #{tpu_custom_call.1} parent=1 // pred_region
      _
    $region13: #{tpu_custom_call.1} parent=1 // pred_fallthru
      _
    // Predicated region
    $region14: #{tpu_custom_call.1} parent=1 // pred_check
      _
    $region15: #{tpu_custom_call.1} parent=1 // pred_check_branch
      %40 = sbr.rel (0) target = $region17
    $region16: #{tpu_custom_call.1} parent=1 // pred_region
      %s42 = ssub.s32 6144, 6144
      %43 = vsyncadd [#allocation7], %s42
      %s44 = sshll.u32 [#allocation8], 4
      %s45 = int_to_ptr.vmem [resolvable:$true] %s44
      %50 = dma.hbm_to_vmem [thread:$0]  %s3, 6144, %s45, [#allocation7], 128, 128, 8
    $region17: #{tpu_custom_call.1} parent=1 // pred_fallthru
      _
    // Predicated region
    $region18: #{tpu_custom_call.1} parent=1 // pred_check
      _
    $region19: #{tpu_custom_call.1} parent=1 // pred_check_branch
      %52 = sbr.rel (0) target = $region21
    $region20: #{tpu_custom_call.1} parent=1 // pred_region
      _
    $region21: #{tpu_custom_call.1} parent=1 // pred_fallthru
      _
    // Predicated region
    $region22: #{tpu_custom_call.1} parent=1 // pred_check
      _
    $region23: #{tpu_custom_call.1} parent=1 // pred_check_branch
      %54 = sbr.rel (0) target = $region25
    $region24: #{tpu_custom_call.1} parent=1 // pred_region
      %55 = dma.done [#allocation4], 384
    $region25: #{tpu_custom_call.1} parent=1 // pred_fallthru
      _
    // Predicated region
    $region26: #{tpu_custom_call.1} parent=1 // pred_check
      _
    $region27: #{tpu_custom_call.1} parent=1 // pred_check_branch
      %57 = sbr.rel (0) target = $region29
    $region28: #{tpu_custom_call.1} parent=1 // pred_region
      %58 = dma.done [#allocation7], 6144
    $region29: #{tpu_custom_call.1} parent=1 // pred_fallthru
      _
    // Predicated region
    $region30: #{tpu_custom_call.1} parent=1 // pred_check
      _
    $region31: #{tpu_custom_call.1} parent=1 // pred_check_branch
      %60 = sbr.rel (0) target = $region33
    $region32: #{tpu_custom_call.1} parent=1 // pred_region
      %61 = dma.done [#allocation7], 6144
    $region33: #{tpu_custom_call.1} parent=1 // pred_fallthru
      _
    %v62 = vld [vmem:[#allocation3] sm:$0xff]
    %v63 = vld [vmem:[#allocation3 + $0x8] sm:$0xff]
    %v64 = vld [vmem:[#allocation3 + $0x10] sm:$0x3f]
    %v65 = vld [vmem:[#allocation6] sm:$0xff]
    %v66 = vld [vmem:[#allocation6 + $0x8] sm:$0xff]
    %v67 = vld [vmem:[#allocation6 + $0x10] sm:$0xff]
    %v68 = vld [vmem:[#allocation6 + $0x18] sm:$0xff]
    %v69 = vld [vmem:[#allocation6 + $0x20] sm:$0xff]
    %v70 = vld [vmem:[#allocation6 + $0x28] sm:$0xff]
    %v71 = vld [vmem:[#allocation6 + $0x30] sm:$0xff]
    %v72 = vld [vmem:[#allocation6 + $0x38] sm:$0xff]
    %v73 = vld [vmem:[#allocation6 + $0x40] sm:$0xff]
    %v74 = vld [vmem:[#allocation6 + $0x48] sm:$0xff]
    %v75 = vld [vmem:[#allocation6 + $0x50] sm:$0xff]
    %v76 = vld [vmem:[#allocation6 + $0x58] sm:$0xff]
    %v77 = vld [vmem:[#allocation6 + $0x60] sm:$0xff]
    %v78 = vld [vmem:[#allocation6 + $0x68] sm:$0xff]
    %v79 = vld [vmem:[#allocation6 + $0x70] sm:$0xff]
    %v80 = vld [vmem:[#allocation6 + $0x78] sm:$0xff]
    %v81 = vld [vmem:[#allocation3 + $0x1] sm:$0xff]
    %v82 = vld [vmem:[#allocation3 + $0x9] sm:$0xff]
    %v83 = vld [vmem:[#allocation3 + $0x11] sm:$0x3f]
    %s84 = scalar_lea.vmem [#allocation6], 128
    %v85 = vld [vmem:[%s84] sm:$0xff]
    %v86 = vld [vmem:[%s84 + $0x8] sm:$0xff]
    %v87 = vld [vmem:[%s84 + $0x10] sm:$0xff]
    %v88 = vld [vmem:[%s84 + $0x18] sm:$0xff]
    %v89 = vld [vmem:[%s84 + $0x20] sm:$0xff]
    %v90 = vld [vmem:[%s84 + $0x28] sm:$0xff]
    %v91 = vld [vmem:[%s84 + $0x30] sm:$0xff]
    %v92 = vld [vmem:[%s84 + $0x38] sm:$0xff]
    %v93 = vld [vmem:[%s84 + $0x40] sm:$0xff]
    %v94 = vld [vmem:[%s84 + $0x48] sm:$0xff]
    %v95 = vld [vmem:[%s84 + $0x50] sm:$0xff]
    %v96 = vld [vmem:[%s84 + $0x58] sm:$0xff]
    %v97 = vld [vmem:[%s84 + $0x60] sm:$0xff]
    %v98 = vld [vmem:[%s84 + $0x68] sm:$0xff]
    %v99 = vld [vmem:[%s84 + $0x70] sm:$0xff]
    %v100 = vld [vmem:[%s84 + $0x78] sm:$0xff]
    %101 = vmatprep.subr.mxu0 0.0
    %102 = vmatpush1.msra.mxu0 %v85
    %103 = vmatprep.subr.mxu0 0.0
    %104 = vmatpush1.msra.mxu0 %v86
    %105 = vmatprep.subr.mxu0 0.0
    %106 = vmatpush1.msra.mxu0 %v87
    %107 = vmatprep.subr.mxu0 0.0
    %108 = vmatpush1.msra.mxu0 %v88
    %109 = vmatprep.subr.mxu0 0.0
    %110 = vmatpush1.msra.mxu0 %v89
    %111 = vmatprep.subr.mxu0 0.0
    %112 = vmatpush1.msra.mxu0 %v90
    %113 = vmatprep.subr.mxu0 0.0
    %114 = vmatpush1.msra.mxu0 %v91
    %115 = vmatprep.subr.mxu0 0.0
    %116 = vmatpush1.msra.mxu0 %v92
    %117 = vmatprep.subr.mxu0 0.0
    %118 = vmatpush1.msra.mxu0 %v93
    %119 = vmatprep.subr.mxu0 0.0
    %120 = vmatpush1.msra.mxu0 %v94
    %121 = vmatprep.subr.mxu0 0.0
    %122 = vmatpush1.msra.mxu0 %v95
    %123 = vmatprep.subr.mxu0 0.0
    %124 = vmatpush1.msra.mxu0 %v96
    %125 = vmatprep.subr.mxu0 0.0
    %126 = vmatpush1.msra.mxu0 %v97
    %127 = vmatprep.subr.mxu0 0.0
    %128 = vmatpush1.msra.mxu0 %v98
    %129 = vmatprep.subr.mxu0 0.0
    %130 = vmatpush1.msra.mxu0 %v99
    %131 = vmatprep.subr.mxu0 0.0
    %132 = vmatpush1.msra.mxu0 %v100
    %133 = vmatprep.subr.mxu0 0.0
    %134 = vmatpush1.msra.mxu0 0.0
    %135 = vmatprep.subr.mxu0 0.0
    %136 = vmatpush1.msra.mxu0 0.0
    %137 = vmatprep.subr.mxu0 0.0
    %138 = vmatpush1.msra.mxu0 0.0
    %139 = vmatprep.subr.mxu0 0.0
    %140 = vmatpush1.msra.mxu0 0.0
    %141 = vmatprep.subr.mxu0 0.0
    %142 = vmatpush1.msra.mxu0 0.0
    %143 = vmatprep.subr.mxu0 0.0
    %144 = vmatpush1.msra.mxu0 0.0
    %145 = vmatprep.subr.mxu0 0.0
    %146 = vmatpush1.msra.mxu0 0.0
    %147 = vmatprep.subr.mxu0 0.0
    %148 = vmatpush1.msra.mxu0 0.0
    %149 = vmatprep.subr.mxu0 0.0
    %150 = vmatpush1.msra.mxu0 0.0
    %151 = vmatprep.subr.mxu0 0.0
    %152 = vmatpush1.msra.mxu0 0.0
    %153 = vmatprep.subr.mxu0 0.0
    %154 = vmatpush1.msra.mxu0 0.0
    %155 = vmatprep.subr.mxu0 0.0
    %156 = vmatpush1.msra.mxu0 0.0
    %157 = vmatprep.subr.mxu0 0.0
    %158 = vmatpush1.msra.mxu0 0.0
    %159 = vmatprep.subr.mxu0 0.0
    %160 = vmatpush1.msra.mxu0 0.0
    %161 = vmatprep.subr.mxu0 0.0
    %162 = vmatpush1.msra.mxu0 0.0
    %163 = vmatprep.subr.mxu0 0.0
    %164 = vmatpush1.msra.mxu0 0.0
    %165 = vmatprep.mubr.f32.mxu0 0.0
    %166 = vmatmul.mubr.f32.gmra.mrb[0].mxu0 %v81
    %v167 = vpop.f32.mrb[0].mxu0
    %v168 = vadd.f32 0.0, %v167
    %v169 = vpop.f32.mrb[0].mxu0
    %170 = vmatprep.mubr.f32.mxu0 0.0
    %171 = vmatmul.mubr.f32.gmra.mrb[0].mxu0 %v82
    %v172 = vpop.f32.mrb[0].mxu0
    %v173 = vadd.f32 0.0, %v172
    %v174 = vpop.f32.mrb[0].mxu0
    %175 = vmatprep.mubr.f32.mxu0 0.0
    %176 = vmatmul.mubr.f32.gmra.mrb[0].mxu0 %v83
    %v177 = vpop.f32.mrb[0].mxu0
    %v178 = vadd.f32 0.0, %v177
    %v179 = vpop.f32.mrb[0].mxu0
    %180 = vdwg.mxu0
    %181 = vmatprep.subr.mxu0 0.0
    %182 = vmatpush1.msra.mxu0 %v65
    %183 = vmatprep.subr.mxu0 0.0
    %184 = vmatpush1.msra.mxu0 %v66
    %185 = vmatprep.subr.mxu0 0.0
    %186 = vmatpush1.msra.mxu0 %v67
    %187 = vmatprep.subr.mxu0 0.0
    %188 = vmatpush1.msra.mxu0 %v68
    %189 = vmatprep.subr.mxu0 0.0
    %190 = vmatpush1.msra.mxu0 %v69
    %191 = vmatprep.subr.mxu0 0.0
    %192 = vmatpush1.msra.mxu0 %v70
    %193 = vmatprep.subr.mxu0 0.0
    %194 = vmatpush1.msra.mxu0 %v71
    %195 = vmatprep.subr.mxu0 0.0
    %196 = vmatpush1.msra.mxu0 %v72
    %197 = vmatprep.subr.mxu0 0.0
    %198 = vmatpush1.msra.mxu0 %v73
    %199 = vmatprep.subr.mxu0 0.0
    %200 = vmatpush1.msra.mxu0 %v74
    %201 = vmatprep.subr.mxu0 0.0
    %202 = vmatpush1.msra.mxu0 %v75
    %203 = vmatprep.subr.mxu0 0.0
    %204 = vmatpush1.msra.mxu0 %v76
    %205 = vmatprep.subr.mxu0 0.0
    %206 = vmatpush1.msra.mxu0 %v77
    %207 = vmatprep.subr.mxu0 0.0
    %208 = vmatpush1.msra.mxu0 %v78
    %209 = vmatprep.subr.mxu0 0.0
    %210 = vmatpush1.msra.mxu0 %v79
    %211 = vmatprep.subr.mxu0 0.0
    %212 = vmatpush1.msra.mxu0 %v80
    %213 = vmatprep.subr.mxu0 0.0
    %214 = vmatpush1.msra.mxu0 0.0
    %215 = vmatprep.subr.mxu0 0.0
    %216 = vmatpush1.msra.mxu0 0.0
    %217 = vmatprep.subr.mxu0 0.0
    %218 = vmatpush1.msra.mxu0 0.0
    %219 = vmatprep.subr.mxu0 0.0
    %220 = vmatpush1.msra.mxu0 0.0
    %221 = vmatprep.subr.mxu0 0.0
    %222 = vmatpush1.msra.mxu0 0.0
    %223 = vmatprep.subr.mxu0 0.0
    %224 = vmatpush1.msra.mxu0 0.0
    %225 = vmatprep.subr.mxu0 0.0
    %226 = vmatpush1.msra.mxu0 0.0
    %227 = vmatprep.subr.mxu0 0.0
    %228 = vmatpush1.msra.mxu0 0.0
    %229 = vmatprep.subr.mxu0 0.0
    %230 = vmatpush1.msra.mxu0 0.0
    %231 = vmatprep.subr.mxu0 0.0
    %232 = vmatpush1.msra.mxu0 0.0
    %233 = vmatprep.subr.mxu0 0.0
    %234 = vmatpush1.msra.mxu0 0.0
    %235 = vmatprep.subr.mxu0 0.0
    %236 = vmatpush1.msra.mxu0 0.0
    %237 = vmatprep.subr.mxu0 0.0
    %238 = vmatpush1.msra.mxu0 0.0
    %239 = vmatprep.subr.mxu0 0.0
    %240 = vmatpush1.msra.mxu0 0.0
    %241 = vmatprep.subr.mxu0 0.0
    %242 = vmatpush1.msra.mxu0 0.0
    %243 = vmatprep.subr.mxu0 0.0
    %244 = vmatpush1.msra.mxu0 0.0
    %245 = vmatprep.mubr.f32.mxu0 0.0
    %246 = vmatmul.mubr.f32.gmra.mrb[0].mxu0 %v62
    %v247 = vpop.f32.mrb[0].mxu0
    %v248 = vadd.f32 %v168, %v247
    %v249 = vpop.f32.mrb[0].mxu0
    %250 = vmatprep.mubr.f32.mxu0 0.0
    %251 = vmatmul.mubr.f32.gmra.mrb[0].mxu0 %v63
    %v252 = vpop.f32.mrb[0].mxu0
    %v253 = vadd.f32 %v173, %v252
    %v254 = vpop.f32.mrb[0].mxu0
    %255 = vmatprep.mubr.f32.mxu0 0.0
    %256 = vmatmul.mubr.f32.gmra.mrb[0].mxu0 %v64
    %v257 = vpop.f32.mrb[0].mxu0
    %v258 = vadd.f32 %v178, %v257
    %v259 = vpop.f32.mrb[0].mxu0
    %260 = vdwg.mxu0
    %v261 = vld [vmem:[#allocation3 + $0x2] sm:$0xff]
    %v262 = vld [vmem:[#allocation3 + $0xa] sm:$0xff]
    %v263 = vld [vmem:[#allocation3 + $0x12] sm:$0x3f]
    %s264 = scalar_lea.vmem [#allocation6], 256
    %v265 = vld [vmem:[%s264] sm:$0xff]
    %v266 = vld [vmem:[%s264 + $0x8] sm:$0xff]
    %v267 = vld [vmem:[%s264 + $0x10] sm:$0xff]
    %v268 = vld [vmem:[%s264 + $0x18] sm:$0xff]
    %v269 = vld [vmem:[%s264 + $0x20] sm:$0xff]
    %v270 = vld [vmem:[%s264 + $0x28] sm:$0xff]
    %v271 = vld [vmem:[%s264 + $0x30] sm:$0xff]
    %v272 = vld [vmem:[%s264 + $0x38] sm:$0xff]
    %v273 = vld [vmem:[%s264 + $0x40] sm:$0xff]
    %v274 = vld [vmem:[%s264 + $0x48] sm:$0xff]
    %v275 = vld [vmem:[%s264 + $0x50] sm:$0xff]
    %v276 = vld [vmem:[%s264 + $0x58] sm:$0xff]
    %v277 = vld [vmem:[%s264 + $0x60] sm:$0xff]
    %v278 = vld [vmem:[%s264 + $0x68] sm:$0xff]
    %v279 = vld [vmem:[%s264 + $0x70] sm:$0xff]
    %v280 = vld [vmem:[%s264 + $0x78] sm:$0xff]
    %281 = vmatprep.subr.mxu0 0.0
    %282 = vmatpush1.msra.mxu0 %v265
    %283 = vmatprep.subr.mxu0 0.0
    %284 = vmatpush1.msra.mxu0 %v266
    %285 = vmatprep.subr.mxu0 0.0
    %286 = vmatpush1.msra.mxu0 %v267
    %287 = vmatprep.subr.mxu0 0.0
    %288 = vmatpush1.msra.mxu0 %v268
    %289 = vmatprep.subr.mxu0 0.0
    %290 = vmatpush1.msra.mxu0 %v269
    %291 = vmatprep.subr.mxu0 0.0
    %292 = vmatpush1.msra.mxu0 %v270
    %293 = vmatprep.subr.mxu0 0.0
    %294 = vmatpush1.msra.mxu0 %v271
    %295 = vmatprep.subr.mxu0 0.0
    %296 = vmatpush1.msra.mxu0 %v272
    %297 = vmatprep.subr.mxu0 0.0
    %298 = vmatpush1.msra.mxu0 %v273
    %299 = vmatprep.subr.mxu0 0.0
    %300 = vmatpush1.msra.mxu0 %v274
    %301 = vmatprep.subr.mxu0 0.0
    %302 = vmatpush1.msra.mxu0 %v275
    %303 = vmatprep.subr.mxu0 0.0
    %304 = vmatpush1.msra.mxu0 %v276
    %305 = vmatprep.subr.mxu0 0.0
    %306 = vmatpush1.msra.mxu0 %v277
    %307 = vmatprep.subr.mxu0 0.0
    %308 = vmatpush1.msra.mxu0 %v278
    %309 = vmatprep.subr.mxu0 0.0
    %310 = vmatpush1.msra.mxu0 %v279
    %311 = vmatprep.subr.mxu0 0.0
    %312 = vmatpush1.msra.mxu0 %v280
    %313 = vmatprep.subr.mxu0 0.0
    %314 = vmatpush1.msra.mxu0 0.0
    %315 = vmatprep.subr.mxu0 0.0
    %316 = vmatpush1.msra.mxu0 0.0
    %317 = vmatprep.subr.mxu0 0.0
    %318 = vmatpush1.msra.mxu0 0.0
    %319 = vmatprep.subr.mxu0 0.0
    %320 = vmatpush1.msra.mxu0 0.0
    %321 = vmatprep.subr.mxu0 0.0
    %322 = vmatpush1.msra.mxu0 0.0
    %323 = vmatprep.subr.mxu0 0.0
    %324 = vmatpush1.msra.mxu0 0.0
    %325 = vmatprep.subr.mxu0 0.0
    %326 = vmatpush1.msra.mxu0 0.0
    %327 = vmatprep.subr.mxu0 0.0
    %328 = vmatpush1.msra.mxu0 0.0
    %329 = vmatprep.subr.mxu0 0.0
    %330 = vmatpush1.msra.mxu0 0.0
    %331 = vmatprep.subr.mxu0 0.0
    %332 = vmatpush1.msra.mxu0 0.0
    %333 = vmatprep.subr.mxu0 0.0
    %334 = vmatpush1.msra.mxu0 0.0
    %335 = vmatprep.subr.mxu0 0.0
    %336 = vmatpush1.msra.mxu0 0.0
    %337 = vmatprep.subr.mxu0 0.0
    %338 = vmatpush1.msra.mxu0 0.0
    %339 = vmatprep.subr.mxu0 0.0
    %340 = vmatpush1.msra.mxu0 0.0
    %341 = vmatprep.subr.mxu0 0.0
    %342 = vmatpush1.msra.mxu0 0.0
    %343 = vmatprep.subr.mxu0 0.0
    %344 = vmatpush1.msra.mxu0 0.0
    %345 = vmatprep.mubr.f32.mxu0 0.0
    %346 = vmatmul.mubr.f32.gmra.mrb[0].mxu0 %v261
    %v347 = vpop.f32.mrb[0].mxu0
    %v348 = vadd.f32 0.0, %v347
    %v349 = vpop.f32.mrb[0].mxu0
    %350 = vmatprep.mubr.f32.mxu0 0.0
    %351 = vmatmul.mubr.f32.gmra.mrb[0].mxu0 %v262
    %v352 = vpop.f32.mrb[0].mxu0
    %v353 = vadd.f32 0.0, %v352
    %v354 = vpop.f32.mrb[0].mxu0
    %355 = vmatprep.mubr.f32.mxu0 0.0
    %356 = vmatmul.mubr.f32.gmra.mrb[0].mxu0 %v263
    %v357 = vpop.f32.mrb[0].mxu0
    %v358 = vadd.f32 0.0, %v357
    %v359 = vpop.f32.mrb[0].mxu0
    %360 = vdwg.mxu0
    %v361 = vadd.f32 %v248, %v348
    %v362 = vadd.f32 %v253, %v353
    %v363 = vadd.f32 %v258, %v358
    %v364 = vld [vmem:[%s2] sm:$0x1]
    %v366 = vlaneseq
    %v367 = vshrl.u32 %v366, 7
    %v368 = vsub.s32 0, %v367
    %v369 = vrot.slane %v364, %v368
    %v371 = vadd.f32 %v361, %v369
    %v372 = vadd.f32 %v362, %v369
    %v373 = vadd.f32 %v363, %v369
    %vm374 = vcmp.ge.f32.partialorder %v371, 0.0
    %vm375 = vcmp.ge.f32.partialorder %v372, 0.0
    %vm376 = vcmp.ge.f32.partialorder %v373, 0.0
    %v377 = vmul.f32 %v371, 0.01
    %v378 = vmul.f32 %v372, 0.01
    %v379 = vmul.f32 %v373, 0.01
    %v380 = vsel %vm374, %v371, %v377
    %v381 = vsel %vm375, %v372, %v378
    %v382 = vsel %vm376, %v373, %v379
    %v383 = vlaneseq
    %v384 = vshrl.u32 %v383, 7
    %v385 = vadd.s32 %v384, 8
    %v386 = vadd.s32 %v384, 16
    %vm387 = vcmp.lt.s32.totalorder %v384, 0
    %v388 = vsub.s32 0, %v384
    %v389 = vsel %vm387, %v388, %v384
    %v390 = vmul.u32.u64.compose %v389, 2863311531
    %v391 = vextract.low.u32 %v390
    %v392 = vextract.high.u32 %v390
    %v393 = vshrl.u32 %v392, 4
    %v394 = vmul.u32 %v393, 24
    %v395 = vsub.s32 %v389, %v394
    %v396 = vsub.s32 0, %v395
    %v397 = vsel %vm387, %v396, %v395
    %vm398 = vcmp.lt.s32.totalorder %v385, 0
    %v399 = vsub.s32 0, %v385
    %v400 = vsel %vm398, %v399, %v385
    %v401 = vmul.u32.u64.compose %v400, 2863311531
    %v402 = vextract.low.u32 %v401
    %v403 = vextract.high.u32 %v401
    %v404 = vshrl.u32 %v403, 4
    %v405 = vmul.u32 %v404, 24
    %v406 = vsub.s32 %v400, %v405
    %v407 = vsub.s32 0, %v406
    %v408 = vsel %vm398, %v407, %v406
    %vm409 = vcmp.lt.s32.totalorder %v386, 0
    %v410 = vsub.s32 0, %v386
    %v411 = vsel %vm409, %v410, %v386
    %v412 = vmul.u32.u64.compose %v411, 2863311531
    %v413 = vextract.low.u32 %v412
    %v414 = vextract.high.u32 %v412
    %v415 = vshrl.u32 %v414, 4
    %v416 = vmul.u32 %v415, 24
    %v417 = vsub.s32 %v411, %v416
    %v418 = vsub.s32 0, %v417
    %v419 = vsel %vm409, %v418, %v417
    %vm420 = vcmp.ne.s32.totalorder %v397, 0
    %vm421 = vcmp.ne.s32.totalorder %v408, 0
    %vm422 = vcmp.ne.s32.totalorder %v419, 0
    %vm423 = vcmp.lt.s32.totalorder %v397, 0
    %vm424 = vcmp.lt.s32.totalorder %v408, 0
    %vm425 = vcmp.lt.s32.totalorder %v419, 0
    %vm426 = vmand %vm423, %vm420
    %vm427 = vmand %vm424, %vm421
    %vm428 = vmand %vm425, %vm422
    %v429 = vadd.s32 %v397, 24
    %v430 = vadd.s32 %v408, 24
    %v431 = vadd.s32 %v419, 24
    %v432 = vsel %vm426, %v429, %v397
    %v433 = vsel %vm427, %v430, %v408
    %v434 = vsel %vm428, %v431, %v419
    %vm435 = vcmp.lt.s32.totalorder %v432, 16
    %vm436 = vcmp.lt.s32.totalorder %v433, 16
    %vm437 = vcmp.lt.s32.totalorder %v434, 16
    %v438 = vsel %vm435, %v380, 0.0
    %v439 = vsel %vm436, %v381, 0.0
    %v440 = vsel %vm437, %v382, 0.0
    %441 = vst [vmem:[#allocation2] sm:$0x1] 0.0
    %442 = vst [vmem:[#allocation2 + $0x17] sm:$0x1] 0.0
    %443 = vst [vmem:[#allocation2 + $0x1] sm:$0xff] %v438
    %444 = vst [vmem:[#allocation2 + $0x9] sm:$0xff] %v439
    %445 = vst [vmem:[#allocation2 + $0x11] sm:$0x3f] %v440
    %v446 = vld [vmem:[#allocation2] sm:$0xff]
    %v447 = vld [vmem:[#allocation2 + $0x8] sm:$0xff]
    %v448 = vld [vmem:[#allocation2 + $0x10] sm:$0x3f]
    %v449 = vld [vmem:[#allocation8] sm:$0xff]
    %v450 = vld [vmem:[#allocation8 + $0x8] sm:$0xff]
    %v451 = vld [vmem:[#allocation8 + $0x10] sm:$0xff]
    %v452 = vld [vmem:[#allocation8 + $0x18] sm:$0xff]
    %v453 = vld [vmem:[#allocation8 + $0x20] sm:$0xff]
    %v454 = vld [vmem:[#allocation8 + $0x28] sm:$0xff]
    %v455 = vld [vmem:[#allocation8 + $0x30] sm:$0xff]
    %v456 = vld [vmem:[#allocation8 + $0x38] sm:$0xff]
    %v457 = vld [vmem:[#allocation8 + $0x40] sm:$0xff]
    %v458 = vld [vmem:[#allocation8 + $0x48] sm:$0xff]
    %v459 = vld [vmem:[#allocation8 + $0x50] sm:$0xff]
    %v460 = vld [vmem:[#allocation8 + $0x58] sm:$0xff]
    %v461 = vld [vmem:[#allocation8 + $0x60] sm:$0xff]
    %v462 = vld [vmem:[#allocation8 + $0x68] sm:$0xff]
    %v463 = vld [vmem:[#allocation8 + $0x70] sm:$0xff]
    %v464 = vld [vmem:[#allocation8 + $0x78] sm:$0xff]
    %v465 = vld [vmem:[#allocation2 + $0x1] sm:$0xff]
    %v466 = vld [vmem:[#allocation2 + $0x9] sm:$0xff]
    %v467 = vld [vmem:[#allocation2 + $0x11] sm:$0x3f]
    %s468 = scalar_lea.vmem [#allocation8], 128
    %v469 = vld [vmem:[%s468] sm:$0xff]
    %v470 = vld [vmem:[%s468 + $0x8] sm:$0xff]
    %v471 = vld [vmem:[%s468 + $0x10] sm:$0xff]
    %v472 = vld [vmem:[%s468 + $0x18] sm:$0xff]
    %v473 = vld [vmem:[%s468 + $0x20] sm:$0xff]
    %v474 = vld [vmem:[%s468 + $0x28] sm:$0xff]
    %v475 = vld [vmem:[%s468 + $0x30] sm:$0xff]
    %v476 = vld [vmem:[%s468 + $0x38] sm:$0xff]
    %v477 = vld [vmem:[%s468 + $0x40] sm:$0xff]
    %v478 = vld [vmem:[%s468 + $0x48] sm:$0xff]
    %v479 = vld [vmem:[%s468 + $0x50] sm:$0xff]
    %v480 = vld [vmem:[%s468 + $0x58] sm:$0xff]
    %v481 = vld [vmem:[%s468 + $0x60] sm:$0xff]
    %v482 = vld [vmem:[%s468 + $0x68] sm:$0xff]
    %v483 = vld [vmem:[%s468 + $0x70] sm:$0xff]
    %v484 = vld [vmem:[%s468 + $0x78] sm:$0xff]
    %485 = vmatprep.subr.mxu0 0.0
    %486 = vmatpush1.msra.mxu0 %v469
    %487 = vmatprep.subr.mxu0 0.0
    %488 = vmatpush1.msra.mxu0 %v470
    %489 = vmatprep.subr.mxu0 0.0
    %490 = vmatpush1.msra.mxu0 %v471
    %491 = vmatprep.subr.mxu0 0.0
    %492 = vmatpush1.msra.mxu0 %v472
    %493 = vmatprep.subr.mxu0 0.0
    %494 = vmatpush1.msra.mxu0 %v473
    %495 = vmatprep.subr.mxu0 0.0
    %496 = vmatpush1.msra.mxu0 %v474
    %497 = vmatprep.subr.mxu0 0.0
    %498 = vmatpush1.msra.mxu0 %v475
    %499 = vmatprep.subr.mxu0 0.0
    %500 = vmatpush1.msra.mxu0 %v476
    %501 = vmatprep.subr.mxu0 0.0
    %502 = vmatpush1.msra.mxu0 %v477
    %503 = vmatprep.subr.mxu0 0.0
    %504 = vmatpush1.msra.mxu0 %v478
    %505 = vmatprep.subr.mxu0 0.0
    %506 = vmatpush1.msra.mxu0 %v479
    %507 = vmatprep.subr.mxu0 0.0
    %508 = vmatpush1.msra.mxu0 %v480
    %509 = vmatprep.subr.mxu0 0.0
    %510 = vmatpush1.msra.mxu0 %v481
    %511 = vmatprep.subr.mxu0 0.0
    %512 = vmatpush1.msra.mxu0 %v482
    %513 = vmatprep.subr.mxu0 0.0
    %514 = vmatpush1.msra.mxu0 %v483
    %515 = vmatprep.subr.mxu0 0.0
    %516 = vmatpush1.msra.mxu0 %v484
    %517 = vmatprep.subr.mxu0 0.0
    %518 = vmatpush1.msra.mxu0 0.0
    %519 = vmatprep.subr.mxu0 0.0
    %520 = vmatpush1.msra.mxu0 0.0
    %521 = vmatprep.subr.mxu0 0.0
    %522 = vmatpush1.msra.mxu0 0.0
    %523 = vmatprep.subr.mxu0 0.0
    %524 = vmatpush1.msra.mxu0 0.0
    %525 = vmatprep.subr.mxu0 0.0
    %526 = vmatpush1.msra.mxu0 0.0
    %527 = vmatprep.subr.mxu0 0.0
    %528 = vmatpush1.msra.mxu0 0.0
    %529 = vmatprep.subr.mxu0 0.0
    %530 = vmatpush1.msra.mxu0 0.0
    %531 = vmatprep.subr.mxu0 0.0
    %532 = vmatpush1.msra.mxu0 0.0
    %533 = vmatprep.subr.mxu0 0.0
    %534 = vmatpush1.msra.mxu0 0.0
    %535 = vmatprep.subr.mxu0 0.0
    %536 = vmatpush1.msra.mxu0 0.0
    %537 = vmatprep.subr.mxu0 0.0
    %538 = vmatpush1.msra.mxu0 0.0
    %539 = vmatprep.subr.mxu0 0.0
    %540 = vmatpush1.msra.mxu0 0.0
    %541 = vmatprep.subr.mxu0 0.0
    %542 = vmatpush1.msra.mxu0 0.0
    %543 = vmatprep.subr.mxu0 0.0
    %544 = vmatpush1.msra.mxu0 0.0
    %545 = vmatprep.subr.mxu0 0.0
    %546 = vmatpush1.msra.mxu0 0.0
    %547 = vmatprep.subr.mxu0 0.0
    %548 = vmatpush1.msra.mxu0 0.0
    %549 = vmatprep.mubr.f32.mxu0 0.0
    %550 = vmatmul.mubr.f32.gmra.mrb[0].mxu0 %v465
    %v551 = vpop.f32.mrb[0].mxu0
    %v552 = vadd.f32 0.0, %v551
    %v553 = vpop.f32.mrb[0].mxu0
    %554 = vmatprep.mubr.f32.mxu0 0.0
    %555 = vmatmul.mubr.f32.gmra.mrb[0].mxu0 %v466
    %v556 = vpop.f32.mrb[0].mxu0
    %v557 = vadd.f32 0.0, %v556
    %v558 = vpop.f32.mrb[0].mxu0
    %559 = vmatprep.mubr.f32.mxu0 0.0
    %560 = vmatmul.mubr.f32.gmra.mrb[0].mxu0 %v467
    %v561 = vpop.f32.mrb[0].mxu0
    %v562 = vadd.f32 0.0, %v561
    %v563 = vpop.f32.mrb[0].mxu0
    %564 = vdwg.mxu0
    %565 = vmatprep.subr.mxu0 0.0
    %566 = vmatpush1.msra.mxu0 %v449
    %567 = vmatprep.subr.mxu0 0.0
    %568 = vmatpush1.msra.mxu0 %v450
    %569 = vmatprep.subr.mxu0 0.0
    %570 = vmatpush1.msra.mxu0 %v451
    %571 = vmatprep.subr.mxu0 0.0
    %572 = vmatpush1.msra.mxu0 %v452
    %573 = vmatprep.subr.mxu0 0.0
    %574 = vmatpush1.msra.mxu0 %v453
    %575 = vmatprep.subr.mxu0 0.0
    %576 = vmatpush1.msra.mxu0 %v454
    %577 = vmatprep.subr.mxu0 0.0
    %578 = vmatpush1.msra.mxu0 %v455
    %579 = vmatprep.subr.mxu0 0.0
    %580 = vmatpush1.msra.mxu0 %v456
    %581 = vmatprep.subr.mxu0 0.0
    %582 = vmatpush1.msra.mxu0 %v457
    %583 = vmatprep.subr.mxu0 0.0
    %584 = vmatpush1.msra.mxu0 %v458
    %585 = vmatprep.subr.mxu0 0.0
    %586 = vmatpush1.msra.mxu0 %v459
    %587 = vmatprep.subr.mxu0 0.0
    %588 = vmatpush1.msra.mxu0 %v460
    %589 = vmatprep.subr.mxu0 0.0
    %590 = vmatpush1.msra.mxu0 %v461
    %591 = vmatprep.subr.mxu0 0.0
    %592 = vmatpush1.msra.mxu0 %v462
    %593 = vmatprep.subr.mxu0 0.0
    %594 = vmatpush1.msra.mxu0 %v463
    %595 = vmatprep.subr.mxu0 0.0
    %596 = vmatpush1.msra.mxu0 %v464
    %597 = vmatprep.subr.mxu0 0.0
    %598 = vmatpush1.msra.mxu0 0.0
    %599 = vmatprep.subr.mxu0 0.0
    %600 = vmatpush1.msra.mxu0 0.0
    %601 = vmatprep.subr.mxu0 0.0
    %602 = vmatpush1.msra.mxu0 0.0
    %603 = vmatprep.subr.mxu0 0.0
    %604 = vmatpush1.msra.mxu0 0.0
    %605 = vmatprep.subr.mxu0 0.0
    %606 = vmatpush1.msra.mxu0 0.0
    %607 = vmatprep.subr.mxu0 0.0
    %608 = vmatpush1.msra.mxu0 0.0
    %609 = vmatprep.subr.mxu0 0.0
    %610 = vmatpush1.msra.mxu0 0.0
    %611 = vmatprep.subr.mxu0 0.0
    %612 = vmatpush1.msra.mxu0 0.0
    %613 = vmatprep.subr.mxu0 0.0
    %614 = vmatpush1.msra.mxu0 0.0
    %615 = vmatprep.subr.mxu0 0.0
    %616 = vmatpush1.msra.mxu0 0.0
    %617 = vmatprep.subr.mxu0 0.0
    %618 = vmatpush1.msra.mxu0 0.0
    %619 = vmatprep.subr.mxu0 0.0
    %620 = vmatpush1.msra.mxu0 0.0
    %621 = vmatprep.subr.mxu0 0.0
    %622 = vmatpush1.msra.mxu0 0.0
    %623 = vmatprep.subr.mxu0 0.0
    %624 = vmatpush1.msra.mxu0 0.0
    %625 = vmatprep.subr.mxu0 0.0
    %626 = vmatpush1.msra.mxu0 0.0
    %627 = vmatprep.subr.mxu0 0.0
    %628 = vmatpush1.msra.mxu0 0.0
    %629 = vmatprep.mubr.f32.mxu0 0.0
    %630 = vmatmul.mubr.f32.gmra.mrb[0].mxu0 %v446
    %v631 = vpop.f32.mrb[0].mxu0
    %v632 = vadd.f32 %v552, %v631
    %v633 = vpop.f32.mrb[0].mxu0
    %634 = vmatprep.mubr.f32.mxu0 0.0
    %635 = vmatmul.mubr.f32.gmra.mrb[0].mxu0 %v447
    %v636 = vpop.f32.mrb[0].mxu0
    %v637 = vadd.f32 %v557, %v636
    %v638 = vpop.f32.mrb[0].mxu0
    %639 = vmatprep.mubr.f32.mxu0 0.0
    %640 = vmatmul.mubr.f32.gmra.mrb[0].mxu0 %v448
    %v641 = vpop.f32.mrb[0].mxu0
    %v642 = vadd.f32 %v562, %v641
    %v643 = vpop.f32.mrb[0].mxu0
    %644 = vdwg.mxu0
    %v645 = vld [vmem:[#allocation2 + $0x2] sm:$0xff]
    %v646 = vld [vmem:[#allocation2 + $0xa] sm:$0xff]
    %v647 = vld [vmem:[#allocation2 + $0x12] sm:$0x3f]
    %s648 = scalar_lea.vmem [#allocation8], 256
    %v649 = vld [vmem:[%s648] sm:$0xff]
    %v650 = vld [vmem:[%s648 + $0x8] sm:$0xff]
    %v651 = vld [vmem:[%s648 + $0x10] sm:$0xff]
    %v652 = vld [vmem:[%s648 + $0x18] sm:$0xff]
    %v653 = vld [vmem:[%s648 + $0x20] sm:$0xff]
    %v654 = vld [vmem:[%s648 + $0x28] sm:$0xff]
    %v655 = vld [vmem:[%s648 + $0x30] sm:$0xff]
    %v656 = vld [vmem:[%s648 + $0x38] sm:$0xff]
    %v657 = vld [vmem:[%s648 + $0x40] sm:$0xff]
    %v658 = vld [vmem:[%s648 + $0x48] sm:$0xff]
    %v659 = vld [vmem:[%s648 + $0x50] sm:$0xff]
    %v660 = vld [vmem:[%s648 + $0x58] sm:$0xff]
    %v661 = vld [vmem:[%s648 + $0x60] sm:$0xff]
    %v662 = vld [vmem:[%s648 + $0x68] sm:$0xff]
    %v663 = vld [vmem:[%s648 + $0x70] sm:$0xff]
    %v664 = vld [vmem:[%s648 + $0x78] sm:$0xff]
    %665 = vmatprep.subr.mxu0 0.0
    %666 = vmatpush1.msra.mxu0 %v649
    %667 = vmatprep.subr.mxu0 0.0
    %668 = vmatpush1.msra.mxu0 %v650
    %669 = vmatprep.subr.mxu0 0.0
    %670 = vmatpush1.msra.mxu0 %v651
    %671 = vmatprep.subr.mxu0 0.0
    %672 = vmatpush1.msra.mxu0 %v652
    %673 = vmatprep.subr.mxu0 0.0
    %674 = vmatpush1.msra.mxu0 %v653
    %675 = vmatprep.subr.mxu0 0.0
    %676 = vmatpush1.msra.mxu0 %v654
    %677 = vmatprep.subr.mxu0 0.0
    %678 = vmatpush1.msra.mxu0 %v655
    %679 = vmatprep.subr.mxu0 0.0
    %680 = vmatpush1.msra.mxu0 %v656
    %681 = vmatprep.subr.mxu0 0.0
    %682 = vmatpush1.msra.mxu0 %v657
    %683 = vmatprep.subr.mxu0 0.0
    %684 = vmatpush1.msra.mxu0 %v658
    %685 = vmatprep.subr.mxu0 0.0
    %686 = vmatpush1.msra.mxu0 %v659
    %687 = vmatprep.subr.mxu0 0.0
    %688 = vmatpush1.msra.mxu0 %v660
    %689 = vmatprep.subr.mxu0 0.0
    %690 = vmatpush1.msra.mxu0 %v661
    %691 = vmatprep.subr.mxu0 0.0
    %692 = vmatpush1.msra.mxu0 %v662
    %693 = vmatprep.subr.mxu0 0.0
    %694 = vmatpush1.msra.mxu0 %v663
    %695 = vmatprep.subr.mxu0 0.0
    %696 = vmatpush1.msra.mxu0 %v664
    %697 = vmatprep.subr.mxu0 0.0
    %698 = vmatpush1.msra.mxu0 0.0
    %699 = vmatprep.subr.mxu0 0.0
    %700 = vmatpush1.msra.mxu0 0.0
    %701 = vmatprep.subr.mxu0 0.0
    %702 = vmatpush1.msra.mxu0 0.0
    %703 = vmatprep.subr.mxu0 0.0
    %704 = vmatpush1.msra.mxu0 0.0
    %705 = vmatprep.subr.mxu0 0.0
    %706 = vmatpush1.msra.mxu0 0.0
    %707 = vmatprep.subr.mxu0 0.0
    %708 = vmatpush1.msra.mxu0 0.0
    %709 = vmatprep.subr.mxu0 0.0
    %710 = vmatpush1.msra.mxu0 0.0
    %711 = vmatprep.subr.mxu0 0.0
    %712 = vmatpush1.msra.mxu0 0.0
    %713 = vmatprep.subr.mxu0 0.0
    %714 = vmatpush1.msra.mxu0 0.0
    %715 = vmatprep.subr.mxu0 0.0
    %716 = vmatpush1.msra.mxu0 0.0
    %717 = vmatprep.subr.mxu0 0.0
    %718 = vmatpush1.msra.mxu0 0.0
    %719 = vmatprep.subr.mxu0 0.0
    %720 = vmatpush1.msra.mxu0 0.0
    %721 = vmatprep.subr.mxu0 0.0
    %722 = vmatpush1.msra.mxu0 0.0
    %723 = vmatprep.subr.mxu0 0.0
    %724 = vmatpush1.msra.mxu0 0.0
    %725 = vmatprep.subr.mxu0 0.0
    %726 = vmatpush1.msra.mxu0 0.0
    %727 = vmatprep.subr.mxu0 0.0
    %728 = vmatpush1.msra.mxu0 0.0
    %729 = vmatprep.mubr.f32.mxu0 0.0
    %730 = vmatmul.mubr.f32.gmra.mrb[0].mxu0 %v645
    %v731 = vpop.f32.mrb[0].mxu0
    %v732 = vadd.f32 0.0, %v731
    %v733 = vpop.f32.mrb[0].mxu0
    %734 = vmatprep.mubr.f32.mxu0 0.0
    %735 = vmatmul.mubr.f32.gmra.mrb[0].mxu0 %v646
    %v736 = vpop.f32.mrb[0].mxu0
    %v737 = vadd.f32 0.0, %v736
    %v738 = vpop.f32.mrb[0].mxu0
    %739 = vmatprep.mubr.f32.mxu0 0.0
    %740 = vmatmul.mubr.f32.gmra.mrb[0].mxu0 %v647
    %v741 = vpop.f32.mrb[0].mxu0
    %v742 = vadd.f32 0.0, %v741
    %v743 = vpop.f32.mrb[0].mxu0
    %744 = vdwg.mxu0
    %v745 = vadd.f32 %v632, %v732
    %v746 = vadd.f32 %v637, %v737
    %v747 = vadd.f32 %v642, %v742
    %v748 = vld [vmem:[%s4] sm:$0x1]
    %v750 = vlaneseq
    %v751 = vshrl.u32 %v750, 7
    %v752 = vsub.s32 0, %v751
    %v753 = vrot.slane %v748, %v752
    %v755 = vadd.f32 %v745, %v753
    %v756 = vadd.f32 %v746, %v753
    %v757 = vadd.f32 %v747, %v753
    %v758 = vld [vmem:[#allocation3 + $0x1] sm:$0xff]
    %v759 = vld [vmem:[#allocation3 + $0x9] sm:$0xff]
    %v760 = vld [vmem:[#allocation3 + $0x11] sm:$0x3f]
    %v761 = vadd.f32 %v755, %v758
    %v762 = vadd.f32 %v756, %v759
    %v763 = vadd.f32 %v757, %v760
    %vm764 = vcmp.ge.f32.partialorder %v761, 0.0
    %vm765 = vcmp.ge.f32.partialorder %v762, 0.0
    %vm766 = vcmp.ge.f32.partialorder %v763, 0.0
    %v767 = vmul.f32 %v761, 0.01
    %v768 = vmul.f32 %v762, 0.01
    %v769 = vmul.f32 %v763, 0.01
    %v770 = vsel %vm764, %v761, %v767
    %v771 = vsel %vm765, %v762, %v768
    %v772 = vsel %vm766, %v763, %v769
    %vm773 = vcmask 1045504
    %v774 = vsel %vm773, %v772, 0.0
    %775 = vst [vmem:[#allocation9] sm:$0xff] %v770
    %776 = vst [vmem:[#allocation9 + $0x8] sm:$0xff] %v771
    %777 = vst [vmem:[#allocation9 + $0x10] sm:$0xff] %v774
    // Predicated region
    $region34: #{tpu_custom_call.1} parent=1 // pred_check
      _
    $region35: #{tpu_custom_call.1} parent=1 // pred_check_branch
      %779 = sbr.rel (0) target = $region37
    $region36: #{tpu_custom_call.1} parent=1 // pred_region
      %s781 = ssub.s32 384, 384
      %782 = vsyncadd [#allocation5], %s781
      %s783 = sshll.u32 [#allocation9], 4
      %s784 = int_to_ptr.vmem [resolvable:$true] %s783
      %789 = dma.vmem_to_hbm [thread:$0]  %s784, 384, %s5, [#allocation5], 128, 128, 8
    $region37: #{tpu_custom_call.1} parent=1 // pred_fallthru
      _
    // Predicated region
    $region38: #{tpu_custom_call.1} parent=1 // pred_check
      _
    $region39: #{tpu_custom_call.1} parent=1 // pred_check_branch
      %791 = sbr.rel (0) target = $region41
    $region40: #{tpu_custom_call.1} parent=1 // pred_region
      %792 = dma.done [#allocation5], 384
    $region41: #{tpu_custom_call.1} parent=1 // pred_fallthru
      _
    %793 = vsyncpa [#allocation4], 1
    %794 = vsyncpa [#allocation7], 1
    %795 = vsyncpa [#allocation5], 1

</llo_original>
